<compile_context>
chip_gen: v5e
topology: v5e:2x2
jax: 0.10.0
libtpu: 0.0.40
codegen_flags: <defaults>
</compile_context>

<pallas_src>
import functools

import jax
import jax.numpy as jnp
from jax.experimental import pallas as pl
from jax.experimental.pallas import tpu as pltpu


def _poly_linear_kernel(w_ref, b_ref, xt_ref, o_ref):
    # w_ref: SMEM (3,) f32, b_ref: SMEM (1,) f32
    # xt_ref: VMEM (3, TILE) f32  (feature-major, observations on lanes)
    # o_ref : VMEM (1, TILE) f32  (lane-dense output slab)
    w0 = w_ref[0]
    w1 = w_ref[1]
    w2 = w_ref[2]
    b = b_ref[0]
    # Three VPU scalar-broadcast FMAs; MXU / XLU / EUP slots stay free.
    o_ref[...] = (
        xt_ref[0:1, :] * w0
        + xt_ref[1:2, :] * w1
        + xt_ref[2:3, :] * w2
        + b
    )


def _round_up(a, m):
    return ((a + m - 1) // m) * m


@functools.partial(jax.jit, static_argnames=("tile",))
def polynomial_regression_forward(x, weight, bias, *, tile=131072):
    """x: (N, 3) f32, weight: (1, 3) f32, bias: (1,) f32 -> (N, 1) f32."""
    n, f = x.shape
    out_f, in_f = weight.shape
    assert f == 3 and in_f == 3 and out_f == 1

    # Tile = multiple of 128 lanes; clamp to the (128-padded) problem size.
    # Default 131072 obs/tile ~= 1.5 MiB of input per buffer: big enough to
    # amortize the ~0.35us/step grid overhead, tiny vs even v7x's 64 MiB VMEM.
    tile = max(128, _round_up(min(tile, _round_up(n, 128)), 128))
    padded_n = _round_up(n, tile)
    num_tiles = padded_n // tile

    # Layout plumbing (fused under jit): feature-major, lane-padded input slab.
    xt = (
        jnp.zeros((f, padded_n), jnp.float32)
        .at[:, :n]
        .set(x.T.astype(jnp.float32))
    )
    w1d = weight.reshape(f).astype(jnp.float32)   # scalars for SMEM
    b1d = bias.reshape(1).astype(jnp.float32)

    out_t = pl.pallas_call(
        _poly_linear_kernel,
        out_shape=jax.ShapeDtypeStruct((1, padded_n), jnp.float32),
        grid=(num_tiles,),
        in_specs=[
            pl.BlockSpec(memory_space=pltpu.MemorySpace.SMEM),   # weight scalars
            pl.BlockSpec(memory_space=pltpu.MemorySpace.SMEM),   # bias scalar
            pl.BlockSpec((f, tile), lambda i: (0, i)),           # (3, TILE) input
        ],
        out_specs=pl.BlockSpec((1, tile), lambda i: (0, i)),     # lane-dense output
        compiler_params=pltpu.CompilerParams(
            dimension_semantics=("parallel",),
        ),
    )(w1d, b1d, xt)

    # Back to the PyTorch-facing (N, 1) shape.
    return out_t[0, :n].reshape(n, 1)


if __name__ == "__main__":
    # Deterministic synthetic inputs / parameters (no checkpoint loading).
    key = jax.random.PRNGKey(0)
    kx, kw, kb = jax.random.split(key, 3)

    # Matches the module's setup: num_observations = 100 rows of 3 polynomial
    # features [x, x^2, x^3] built from linspace(-3, 3, 100).
    N, F = 100, 3
    base = jnp.linspace(-3.0, 3.0, N, dtype=jnp.float32)
    x = jnp.stack([base, base**2, base**3], axis=-1)  # (N, 3)

    # nn.Linear(3, 1) parameters: weight (1, 3), bias (1,)
    weight = jax.random.normal(kw, (1, F), dtype=jnp.float32) * 0.1
    bias = jax.random.normal(kb, (1,), dtype=jnp.float32) * 0.1

    out = polynomial_regression_forward(x, weight, bias)
    out = jax.block_until_ready(out)

    # Reference check against plain JAX (same semantics as torch's Linear).
    ref = x @ weight.T + bias
    assert out.shape == (N, 1)
    assert jnp.allclose(out, ref, atol=1e-5, rtol=1e-5)

    print("KERNEL_OK")
</pallas_src>

<mosaic_0001>
module attributes {stable_mosaic.version = 11 : i64} {
  func.func @_poly_linear_kernel(%arg0: i32, %arg1: memref<3xf32, #tpu.memory_space<smem>>, %arg2: memref<1xf32, #tpu.memory_space<smem>>, %arg3: memref<3x128xf32, #tpu.memory_space<vmem>>, %arg4: memref<1x128xf32, #tpu.memory_space<vmem>>) attributes {dimension_semantics = [#tpu.dimension_semantics<parallel>], iteration_bounds = array<i64: 1>, scalar_prefetch = 0 : i64, scratch_operands = 0 : i64, tpu.core_type = #tpu.core_type<tc>, window_params = [{transform_indices = @transform_0, window_bounds = array<i64: 3>}, {transform_indices = @transform_1, window_bounds = array<i64: 1>}, {transform_indices = @transform_2, window_bounds = array<i64: 3, 128>}, {transform_indices = @transform_3, window_bounds = array<i64: 1, 128>}]} {
    %c0 = arith.constant 0 : index
    %0 = memref.load %arg1[%c0] : memref<3xf32, #tpu.memory_space<smem>>
    %c1 = arith.constant 1 : index
    %1 = memref.load %arg1[%c1] : memref<3xf32, #tpu.memory_space<smem>>
    %c2 = arith.constant 2 : index
    %2 = memref.load %arg1[%c2] : memref<3xf32, #tpu.memory_space<smem>>
    %c0_0 = arith.constant 0 : index
    %3 = memref.load %arg2[%c0_0] : memref<1xf32, #tpu.memory_space<smem>>
    %c0_1 = arith.constant 0 : index
    %c0_2 = arith.constant 0 : index
    %4 = vector.load %arg3[%c0_1, %c0_2] : memref<3x128xf32, #tpu.memory_space<vmem>>, vector<1x128xf32>
    %5 = vector.broadcast %0 : f32 to vector<1x128xf32>
    %6 = arith.mulf %4, %5 : vector<1x128xf32>
    %c1_3 = arith.constant 1 : index
    %c0_4 = arith.constant 0 : index
    %7 = vector.load %arg3[%c1_3, %c0_4] : memref<3x128xf32, #tpu.memory_space<vmem>>, vector<1x128xf32>
    %8 = vector.broadcast %1 : f32 to vector<1x128xf32>
    %9 = arith.mulf %7, %8 : vector<1x128xf32>
    %10 = arith.addf %6, %9 : vector<1x128xf32>
    %c2_5 = arith.constant 2 : index
    %c0_6 = arith.constant 0 : index
    %11 = vector.load %arg3[%c2_5, %c0_6] : memref<3x128xf32, #tpu.memory_space<vmem>>, vector<1x128xf32>
    %12 = vector.broadcast %2 : f32 to vector<1x128xf32>
    %13 = arith.mulf %11, %12 : vector<1x128xf32>
    %14 = arith.addf %10, %13 : vector<1x128xf32>
    %15 = vector.broadcast %3 : f32 to vector<1x128xf32>
    %16 = arith.addf %14, %15 : vector<1x128xf32>
    %c0_7 = arith.constant 0 : index
    %c0_8 = arith.constant 0 : index
    %17 = vector.load %arg4[%c0_7, %c0_8] : memref<1x128xf32, #tpu.memory_space<vmem>>, vector<1x128xf32>
    tpu.vector_store %arg4[%c0_7, %c0_8], %16 {strides = array<i32>} : memref<1x128xf32, #tpu.memory_space<vmem>>, vector<1x128xf32>,
    return
  }
  func.func @transform_0(%arg0: i32) -> i32 {
    %c0_i32 = arith.constant 0 : i32
    %c0_i32_0 = arith.constant 0 : i32
    return %c0_i32 : i32
  }
  func.func @transform_1(%arg0: i32) -> i32 {
    %c0_i32 = arith.constant 0 : i32
    %c0_i32_0 = arith.constant 0 : i32
    return %c0_i32 : i32
  }
  func.func @transform_2(%arg0: i32) -> (i32, i32) {
    %c0_i32 = arith.constant 0 : i32
    %c0_i32_0 = arith.constant 0 : i32
    return %c0_i32, %arg0 : i32, i32
  }
  func.func @transform_3(%arg0: i32) -> (i32, i32) {
    %c0_i32 = arith.constant 0 : i32
    %c0_i32_0 = arith.constant 0 : i32
    return %c0_i32, %arg0 : i32, i32
  }
}

</mosaic_0001>

<llo_original>
// kernel: polynomial_regression_forward.1
$region0: #{polynomial_regression_forward.1}
  #allocation0 [shape = 'u32[]', space=smem, size = 0x4, offset = 0x4, fixed_abs, tag = 'smem constant byte address 0x4 - core index']
  #allocation1 [shape = 'u32[72,128]{1,0:T(1,128)}', space=vmem, size = 0x9000, scoped, tag = 'internal scratch']
  #allocation2 [shape = 'f32[1]{0:T(128)S(6)}', space=smem, size = 0x200, scoped, tag = 'scoped memory for polynomial_regression_forward.1']
  %s0 = inlined_call_operand.vmem [shape: f32[3], index: 0, kind: input, shape index: {}]
  %s1 = inlined_call_operand.<no memory space> [shape: f32[1], index: 1, kind: input, shape index: {}]
  %s2 = inlined_call_operand.vmem [shape: f32[3,128], index: 2, kind: input, shape index: {}]
  %s3 = inlined_call_operand.vmem [shape: f32[1,128], index: 3, kind: output, shape index: {}]
  %s4 = sld [smem:[#allocation0]]
  $region26: #{polynomial_regression_forward.1} parent=0
    _
  %s6 = ssub.s32 1, %s4
  %s7 = scalar_select 0, %s6, %s4
  %8 = sst [smem:[#allocation2]] %s1
  $region1: #{polynomial_regression_forward.1} parent=0
    #allocation3 [shape = 'u8[512]{0}', space=smem, size = 0x200, scoped, tag = 'input window, operand 0, single buffered']
    #allocation4 [shape = 's32[1]{0}', space=sflag, size = 0x4, scoped, tag = 'scoped memory for polynomial_regression_forward.1']
    %9 = vsyncpa [#allocation4], 0
    // Predicated region
    $region2: #{polynomial_regression_forward.1} parent=1 // pred_check
      _
    $region3: #{polynomial_regression_forward.1} parent=1 // pred_check_branch
      %11 = sbr.rel (0) target = $region5
    $region4: #{polynomial_regression_forward.1} parent=1 // pred_region
      %13 = vsyncadd [#allocation4], 0
      %s15 = sshll.u32 %s0, 4
      %s16 = int_to_ptr.vmem [resolvable:$true] %s15
      %18 = dma.vmem_to_smem %s16, 16, [#allocation3], [#allocation4]
    $region5: #{polynomial_regression_forward.1} parent=1 // pred_fallthru
      _
    // Predicated region
    $region6: #{polynomial_regression_forward.1} parent=1 // pred_check
      _
    $region7: #{polynomial_regression_forward.1} parent=1 // pred_check_branch
      %20 = sbr.rel (0) target = $region9
    $region8: #{polynomial_regression_forward.1} parent=1 // pred_region
      _
    $region9: #{polynomial_regression_forward.1} parent=1 // pred_fallthru
      _
    // Predicated region
    $region10: #{polynomial_regression_forward.1} parent=1 // pred_check
      _
    $region11: #{polynomial_regression_forward.1} parent=1 // pred_check_branch
      %22 = sbr.rel (0) target = $region13
    $region12: #{polynomial_regression_forward.1} parent=1 // pred_region
      _
    $region13: #{polynomial_regression_forward.1} parent=1 // pred_fallthru
      _
    // Predicated region
    $region14: #{polynomial_regression_forward.1} parent=1 // pred_check
      _
    $region15: #{polynomial_regression_forward.1} parent=1 // pred_check_branch
      %24 = sbr.rel (0) target = $region17
    $region16: #{polynomial_regression_forward.1} parent=1 // pred_region
      %26 = dma.done [#allocation4], 16
    $region17: #{polynomial_regression_forward.1} parent=1 // pred_fallthru
      _
    %27 = sfence
    %s28 = sld [smem:[#allocation3]]
    %s29 = sld [smem:[#allocation3 + $0x1]]
    %s30 = sld [smem:[#allocation3 + $0x2]]
    %s31 = sld [smem:[#allocation2]]
    %v32 = vld [vmem:[%s2] sm:$0x1]
    %v33 = vstv %s28
    %v34 = vmul.f32 %v32, %v33
    %v35 = vld [vmem:[%s2 + $0x1] sm:$0x1]
    %v36 = vstv %s29
    %v37 = vmul.f32 %v35, %v36
    %v38 = vadd.f32 %v34, %v37
    %v39 = vld [vmem:[%s2 + $0x2] sm:$0x1]
    %v40 = vstv %s30
    %v41 = vmul.f32 %v39, %v40
    %v42 = vadd.f32 %v38, %v41
    %v43 = vstv %s31
    %v44 = vadd.f32 %v42, %v43
    %45 = vst [vmem:[%s3] sm:$0x1] %v44
    // Predicated region
    $region18: #{polynomial_regression_forward.1} parent=1 // pred_check
      _
    $region19: #{polynomial_regression_forward.1} parent=1 // pred_check_branch
      %47 = sbr.rel (0) target = $region21
    $region20: #{polynomial_regression_forward.1} parent=1 // pred_region
      _
    $region21: #{polynomial_regression_forward.1} parent=1 // pred_fallthru
      _
    // Predicated region
    $region22: #{polynomial_regression_forward.1} parent=1 // pred_check
      _
    $region23: #{polynomial_regression_forward.1} parent=1 // pred_check_branch
      %49 = sbr.rel (0) target = $region25
    $region24: #{polynomial_regression_forward.1} parent=1 // pred_region
      _
    $region25: #{polynomial_regression_forward.1} parent=1 // pred_fallthru
      _
    %50 = vsyncpa [#allocation4], 1

</llo_original>
